<compile_context>
chip_gen: v7x
topology: tpu7x:2x2x1
jax: 0.10.0
libtpu: 0.0.40
codegen_flags: <defaults>
</compile_context>

<pallas_src>
import functools
import math

import jax
import jax.numpy as jnp
from jax import lax
from jax.experimental import pallas as pl
from jax.experimental.pallas import tpu as pltpu

_EPS = 1e-5


# ----------------------------- Pallas kernel --------------------------------

def _adain_to_rgb_kernel(x_ref, s_ref, wfc_ref, bfc_ref, wrgb_ref, brgb_ref,
                         o_ref):
    """Fused AdaIN + 1x1 conv for a block of `bb` batch elements.

    x_ref   : (bb, C, S)   activations, channel-major (S = H*W), f32
    s_ref   : (bb, 1, D)   style vectors, f32
    wfc_ref : (2C, D)      style->(gamma,beta) linear weight (PyTorch layout)
    bfc_ref : (2C, 1)      style->(gamma,beta) linear bias
    wrgb_ref: (Cout, C)    1x1 conv weight
    brgb_ref: (Cout, 1)    1x1 conv bias
    o_ref   : (bb, Cout, S) output, channel-major, f32
    """
    C = wrgb_ref.shape[1]
    bb = x_ref.shape[0]

    # Single MXU push for the whole style block, transposed RHS so the result
    # comes out channel-on-sublane: (2C, D) x (bb, D)^T -> (2C, bb).
    s2 = s_ref[...][:, 0, :]                                   # (bb, D)
    gb = lax.dot_general(
        wfc_ref[...], s2,
        dimension_numbers=(((1,), (1,)), ((), ())),
        preferred_element_type=jnp.float32) + bfc_ref[...]     # (2C, bb)

    w = wrgb_ref[...]                                          # (Cout, C)
    bias = brgb_ref[...]                                       # (Cout, 1)

    # bb is a tiny static block size (1 or 2 here) -> unrolled loop.
    for b in range(bb):
        x = x_ref[b]                                           # (C, S) f32

        # InstanceNorm2d stats (biased variance) over the spatial/lane axis.
        mean = jnp.mean(x, axis=-1, keepdims=True)             # (C, 1)
        cen = x - mean
        var = jnp.mean(cen * cen, axis=-1, keepdims=True)      # (C, 1)
        inv_std = lax.rsqrt(var + _EPS)                        # (C, 1)

        gamma = gb[:C, b:b + 1]                                # (C, 1)
        beta = gb[C:, b:b + 1]                                 # (C, 1)

        # Fused norm + AdaIN affine: one elementwise pass over (C, S).
        scale = (1.0 + gamma) * inv_std                        # (C, 1)
        shift = beta - mean * scale                            # (C, 1)
        y = x * scale + shift                                  # (C, S)

        # 1x1 conv == channel matmul: (Cout, C) @ (C, S) -> (Cout, S).
        o_ref[b] = jnp.dot(w, y, preferred_element_type=jnp.float32) + bias


# ------------------------------ forward pass --------------------------------

def _pick_batch_block(batch):
    """One grid step per TensorCore: 2 TCs/chip on v7x, 1 on v5e/v6e."""
    try:
        kind = jax.devices()[0].device_kind.lower()
    except Exception:  # pragma: no cover - defensive
        kind = ""
    n_tc = 2 if "v7" in kind else 1
    if n_tc > 1 and batch % n_tc == 0:
        return batch // n_tc
    return batch  # single step (also the fallback for odd B on v7x)


@functools.partial(jax.jit, static_argnames=("batch_block",))
def _forward_jit(params, x_nchw, s, *, batch_block):
    B, C, H, W = x_nchw.shape
    S = H * W
    D = s.shape[-1]
    Cout = params["w_rgb"].shape[0]
    bb = batch_block
    assert B % bb == 0, (B, bb)

    # Pure reshapes only -- no layout transposes outside the kernel.
    x = x_nchw.reshape(B, C, S).astype(jnp.float32)
    s3 = s.reshape(B, 1, D).astype(jnp.float32)

    out = pl.pallas_call(
        _adain_to_rgb_kernel,
        out_shape=jax.ShapeDtypeStruct((B, Cout, S), jnp.float32),
        grid=(B // bb,),
        in_specs=[
            pl.BlockSpec((bb, C, S), lambda i: (i, 0, 0)),     # x slab
            pl.BlockSpec((bb, 1, D), lambda i: (i, 0, 0)),     # style
            pl.BlockSpec((2 * C, D), lambda i: (0, 0)),        # W_fc
            pl.BlockSpec((2 * C, 1), lambda i: (0, 0)),        # b_fc
            pl.BlockSpec((Cout, C), lambda i: (0, 0)),         # to_rgb weight
            pl.BlockSpec((Cout, 1), lambda i: (0, 0)),         # to_rgb bias
        ],
        out_specs=pl.BlockSpec((bb, Cout, S), lambda i: (i, 0, 0)),
        compiler_params=pltpu.CompilerParams(
            dimension_semantics=("parallel",)),                # v7x: 2 TCs split
    )(x, s3, params["w_fc"], params["b_fc"], params["w_rgb"], params["b_rgb"])

    return out.reshape(B, Cout, H, W)                          # NCHW, free


def outconv_inst_forward(params, x_nchw, s, batch_block=None):
    if batch_block is None:
        batch_block = _pick_batch_block(x_nchw.shape[0])
    return _forward_jit(params, x_nchw, s, batch_block=batch_block)


# ------------------- deterministic init + kernel-layout prep ----------------

def init_raw_params(key, in_channels, out_channels, style_dim):
    """PyTorch-layout parameters with PyTorch-default uniform init."""
    kfw, kfb, kcw, kcb = jax.random.split(key, 4)
    bound_fc = 1.0 / math.sqrt(style_dim)
    w_fc = jax.random.uniform(kfw, (2 * in_channels, style_dim), jnp.float32,
                              -bound_fc, bound_fc)
    b_fc = jax.random.uniform(kfb, (2 * in_channels,), jnp.float32,
                              -bound_fc, bound_fc)
    bound_c = 1.0 / math.sqrt(in_channels * 1 * 1)
    w_rgb = jax.random.uniform(kcw, (out_channels, in_channels, 1, 1),
                               jnp.float32, -bound_c, bound_c)
    b_rgb = jax.random.uniform(kcb, (out_channels,), jnp.float32,
                               -bound_c, bound_c)
    return {"w_fc": w_fc, "b_fc": b_fc, "w_rgb": w_rgb, "b_rgb": b_rgb}


def prepare_params(raw):
    """One-time reshapes into kernel layouts (no transposes, no padding)."""
    two_c = raw["w_fc"].shape[0]
    cout = raw["w_rgb"].shape[0]
    return {
        "w_fc": raw["w_fc"],                                   # (2C, D) as-is
        "b_fc": raw["b_fc"].reshape(two_c, 1),                 # (2C, 1)
        "w_rgb": raw["w_rgb"][:, :, 0, 0],                     # (Cout, Cin)
        "b_rgb": raw["b_rgb"].reshape(cout, 1),                # (Cout, 1)
    }


# ---------------------------- pure-JAX reference -----------------------------

def reference_forward(raw, x_nchw, s):
    hp = jnp.dot(s, raw["w_fc"].T,
                 precision=lax.Precision.HIGHEST) + raw["b_fc"]  # (B, 2C)
    C = x_nchw.shape[1]
    gamma = hp[:, :C][:, :, None, None]
    beta = hp[:, C:][:, :, None, None]
    mean = jnp.mean(x_nchw, axis=(2, 3), keepdims=True)
    var = jnp.mean((x_nchw - mean) ** 2, axis=(2, 3), keepdims=True)
    xhat = (x_nchw - mean) * lax.rsqrt(var + _EPS)
    y = (1.0 + gamma) * xhat + beta
    w = raw["w_rgb"][:, :, 0, 0]                               # (Cout, Cin)
    out = jnp.einsum("bchw,oc->bohw", y, w, precision=lax.Precision.HIGHEST)
    return out + raw["b_rgb"][None, :, None, None]


# ----------------------------------- main ------------------------------------

if __name__ == "__main__":
    key = jax.random.PRNGKey(0)
    kp, kx, ks = jax.random.split(key, 3)

    in_channels, out_channels, style_dim = 64, 3, 128
    B, H, W = 2, 16, 16

    raw = init_raw_params(kp, in_channels, out_channels, style_dim)
    params = prepare_params(raw)

    x = jax.random.normal(kx, (B, in_channels, H, W), jnp.float32)
    s = jax.random.normal(ks, (B, style_dim), jnp.float32)

    out = outconv_inst_forward(params, x, s)
    out = jax.block_until_ready(out)

    assert out.shape == (B, out_channels, H, W)
    assert bool(jnp.all(jnp.isfinite(out)))

    ref = reference_forward(raw, x, s)
    max_err = float(jnp.max(jnp.abs(out - ref)))
    assert bool(jnp.allclose(out, ref, atol=5e-3, rtol=5e-3)), max_err

    print("KERNEL_OK")
</pallas_src>

<mosaic_0001>
module attributes {stable_mosaic.version = 11 : i64} {
  func.func @_adain_to_rgb_kernel(%arg0: i32, %arg1: memref<2x64x256xf32, #tpu.memory_space<vmem>>, %arg2: memref<2x1x128xf32, #tpu.memory_space<vmem>>, %arg3: memref<128x128xf32, #tpu.memory_space<vmem>>, %arg4: memref<128x1xf32, #tpu.memory_space<vmem>>, %arg5: memref<3x64xf32, #tpu.memory_space<vmem>>, %arg6: memref<3x1xf32, #tpu.memory_space<vmem>>, %arg7: memref<2x3x256xf32, #tpu.memory_space<vmem>>) attributes {dimension_semantics = [#tpu.dimension_semantics<parallel>], iteration_bounds = array<i64: 1>, scalar_prefetch = 0 : i64, scratch_operands = 0 : i64, tpu.core_type = #tpu.core_type<tc>, window_params = [{transform_indices = @transform_0, window_bounds = array<i64: 2, 64, 256>}, {transform_indices = @transform_1, window_bounds = array<i64: 2, 1, 128>}, {pipeline_mode = #tpu.pipeline_mode<synchronous>, transform_indices = @transform_2, window_bounds = array<i64: 128, 128>}, {pipeline_mode = #tpu.pipeline_mode<synchronous>, transform_indices = @transform_3, window_bounds = array<i64: 128, 1>}, {pipeline_mode = #tpu.pipeline_mode<synchronous>, transform_indices = @transform_4, window_bounds = array<i64: 3, 64>}, {pipeline_mode = #tpu.pipeline_mode<synchronous>, transform_indices = @transform_5, window_bounds = array<i64: 3, 1>}, {transform_indices = @transform_6, window_bounds = array<i64: 2, 3, 256>}]} {
    %c0 = arith.constant 0 : index
    %c0_0 = arith.constant 0 : index
    %c0_1 = arith.constant 0 : index
    %0 = vector.load %arg2[%c0, %c0_0, %c0_1] : memref<2x1x128xf32, #tpu.memory_space<vmem>>, vector<2x1x128xf32>
    %1 = vector.shape_cast %0 : vector<2x1x128xf32> to vector<2x128xf32>
    %c0_2 = arith.constant 0 : index
    %c0_3 = arith.constant 0 : index
    %2 = vector.load %arg3[%c0_2, %c0_3] : memref<128x128xf32, #tpu.memory_space<vmem>>, vector<128x128xf32>
    %cst = arith.constant dense<0.000000e+00> : vector<128x2xf32>
    %3 = tpu.matmul %2, %1, %cst {dimension_numbers = #tpu.dot_dimension_numbers<[1], [1], [0], [0], [0, 0, 1, 0], [], []>} : vector<128x128xf32>, vector<2x128xf32>, vector<128x2xf32> -> vector<128x2xf32>
    %c0_4 = arith.constant 0 : index
    %c0_5 = arith.constant 0 : index
    %4 = vector.load %arg4[%c0_4, %c0_5] : memref<128x1xf32, #tpu.memory_space<vmem>>, vector<128x1xf32>
    %5 = vector.broadcast %4 : vector<128x1xf32> to vector<128x2xf32>
    %6 = arith.addf %3, %5 : vector<128x2xf32>
    %c0_6 = arith.constant 0 : index
    %c0_7 = arith.constant 0 : index
    %7 = vector.load %arg5[%c0_6, %c0_7] : memref<3x64xf32, #tpu.memory_space<vmem>>, vector<3x64xf32>
    %c0_8 = arith.constant 0 : index
    %c0_9 = arith.constant 0 : index
    %8 = vector.load %arg6[%c0_8, %c0_9] : memref<3x1xf32, #tpu.memory_space<vmem>>, vector<3x1xf32>
    %c0_10 = arith.constant 0 : index
    %c0_11 = arith.constant 0 : index
    %c0_12 = arith.constant 0 : index
    %9 = vector.load %arg1[%c0_10, %c0_11, %c0_12] : memref<2x64x256xf32, #tpu.memory_space<vmem>>, vector<1x64x256xf32>
    %10 = vector.shape_cast %9 : vector<1x64x256xf32> to vector<64x256xf32>
    %cst_13 = arith.constant dense<0.000000e+00> : vector<64xf32>
    %11 = vector.multi_reduction <add>, %10, %cst_13 [1] : vector<64x256xf32> to vector<64xf32>
    %12 = vector.shape_cast %11 : vector<64xf32> to vector<64x1xf32>
    %cst_14 = arith.constant 2.560000e+02 : f32
    %13 = vector.broadcast %cst_14 : f32 to vector<64x1xf32>
    %14 = arith.divf %12, %13 : vector<64x1xf32>
    %15 = vector.broadcast %14 : vector<64x1xf32> to vector<64x256xf32>
    %16 = arith.subf %10, %15 : vector<64x256xf32>
    %17 = arith.mulf %16, %16 : vector<64x256xf32>
    %cst_15 = arith.constant dense<0.000000e+00> : vector<64xf32>
    %18 = vector.multi_reduction <add>, %17, %cst_15 [1] : vector<64x256xf32> to vector<64xf32>
    %19 = vector.shape_cast %18 : vector<64xf32> to vector<64x1xf32>
    %cst_16 = arith.constant 2.560000e+02 : f32
    %20 = vector.broadcast %cst_16 : f32 to vector<64x1xf32>
    %21 = arith.divf %19, %20 : vector<64x1xf32>
    %cst_17 = arith.constant 9.99999974E-6 : f32
    %22 = vector.broadcast %cst_17 : f32 to vector<64x1xf32>
    %23 = arith.addf %21, %22 : vector<64x1xf32>
    %24 = math.rsqrt %23 : vector<64x1xf32>
    %25 = vector.extract_strided_slice %6 {offsets = [0, 0], sizes = [64, 1], strides = [1, 1]} : vector<128x2xf32> to vector<64x1xf32>
    %26 = vector.extract_strided_slice %6 {offsets = [64, 0], sizes = [64, 1], strides = [1, 1]} : vector<128x2xf32> to vector<64x1xf32>
    %cst_18 = arith.constant 1.000000e+00 : f32
    %27 = vector.broadcast %cst_18 : f32 to vector<64x1xf32>
    %28 = arith.addf %27, %25 : vector<64x1xf32>
    %29 = arith.mulf %28, %24 : vector<64x1xf32>
    %30 = arith.mulf %14, %29 : vector<64x1xf32>
    %31 = arith.subf %26, %30 : vector<64x1xf32>
    %32 = vector.broadcast %29 : vector<64x1xf32> to vector<64x256xf32>
    %33 = arith.mulf %10, %32 : vector<64x256xf32>
    %34 = vector.broadcast %31 : vector<64x1xf32> to vector<64x256xf32>
    %35 = arith.addf %33, %34 : vector<64x256xf32>
    %cst_19 = arith.constant dense<0.000000e+00> : vector<3x256xf32>
    %36 = tpu.matmul %7, %35, %cst_19 {dimension_numbers = #tpu.dot_dimension_numbers<[1], [0], [0], [1], [0, 0, 1, 1], [], []>} : vector<3x64xf32>, vector<64x256xf32>, vector<3x256xf32> -> vector<3x256xf32>
    %37 = vector.broadcast %8 : vector<3x1xf32> to vector<3x256xf32>
    %38 = arith.addf %36, %37 : vector<3x256xf32>
    %c0_20 = arith.constant 0 : index
    %c0_21 = arith.constant 0 : index
    %c0_22 = arith.constant 0 : index
    %39 = vector.load %arg7[%c0_20, %c0_21, %c0_22] : memref<2x3x256xf32, #tpu.memory_space<vmem>>, vector<1x3x256xf32>
    %40 = vector.shape_cast %39 : vector<1x3x256xf32> to vector<3x256xf32>
    %41 = vector.shape_cast %38 : vector<3x256xf32> to vector<1x3x256xf32>
    tpu.vector_store %arg7[%c0_20, %c0_21, %c0_22], %41 {strides = array<i32>} : memref<2x3x256xf32, #tpu.memory_space<vmem>>, vector<1x3x256xf32>,
    %c1 = arith.constant 1 : index
    %c0_23 = arith.constant 0 : index
    %c0_24 = arith.constant 0 : index
    %42 = vector.load %arg1[%c1, %c0_23, %c0_24] : memref<2x64x256xf32, #tpu.memory_space<vmem>>, vector<1x64x256xf32>
    %43 = vector.shape_cast %42 : vector<1x64x256xf32> to vector<64x256xf32>
    %cst_25 = arith.constant dense<0.000000e+00> : vector<64xf32>
    %44 = vector.multi_reduction <add>, %43, %cst_25 [1] : vector<64x256xf32> to vector<64xf32>
    %45 = vector.shape_cast %44 : vector<64xf32> to vector<64x1xf32>
    %cst_26 = arith.constant 2.560000e+02 : f32
    %46 = vector.broadcast %cst_26 : f32 to vector<64x1xf32>
    %47 = arith.divf %45, %46 : vector<64x1xf32>
    %48 = vector.broadcast %47 : vector<64x1xf32> to vector<64x256xf32>
    %49 = arith.subf %43, %48 : vector<64x256xf32>
    %50 = arith.mulf %49, %49 : vector<64x256xf32>
    %cst_27 = arith.constant dense<0.000000e+00> : vector<64xf32>
    %51 = vector.multi_reduction <add>, %50, %cst_27 [1] : vector<64x256xf32> to vector<64xf32>
    %52 = vector.shape_cast %51 : vector<64xf32> to vector<64x1xf32>
    %cst_28 = arith.constant 2.560000e+02 : f32
    %53 = vector.broadcast %cst_28 : f32 to vector<64x1xf32>
    %54 = arith.divf %52, %53 : vector<64x1xf32>
    %cst_29 = arith.constant 9.99999974E-6 : f32
    %55 = vector.broadcast %cst_29 : f32 to vector<64x1xf32>
    %56 = arith.addf %54, %55 : vector<64x1xf32>
    %57 = math.rsqrt %56 : vector<64x1xf32>
    %58 = vector.extract_strided_slice %6 {offsets = [0, 1], sizes = [64, 1], strides = [1, 1]} : vector<128x2xf32> to vector<64x1xf32>
    %59 = vector.extract_strided_slice %6 {offsets = [64, 1], sizes = [64, 1], strides = [1, 1]} : vector<128x2xf32> to vector<64x1xf32>
    %cst_30 = arith.constant 1.000000e+00 : f32
    %60 = vector.broadcast %cst_30 : f32 to vector<64x1xf32>
    %61 = arith.addf %60, %58 : vector<64x1xf32>
    %62 = arith.mulf %61, %57 : vector<64x1xf32>
    %63 = arith.mulf %47, %62 : vector<64x1xf32>
    %64 = arith.subf %59, %63 : vector<64x1xf32>
    %65 = vector.broadcast %62 : vector<64x1xf32> to vector<64x256xf32>
    %66 = arith.mulf %43, %65 : vector<64x256xf32>
    %67 = vector.broadcast %64 : vector<64x1xf32> to vector<64x256xf32>
    %68 = arith.addf %66, %67 : vector<64x256xf32>
    %cst_31 = arith.constant dense<0.000000e+00> : vector<3x256xf32>
    %69 = tpu.matmul %7, %68, %cst_31 {dimension_numbers = #tpu.dot_dimension_numbers<[1], [0], [0], [1], [0, 0, 1, 1], [], []>} : vector<3x64xf32>, vector<64x256xf32>, vector<3x256xf32> -> vector<3x256xf32>
    %70 = vector.broadcast %8 : vector<3x1xf32> to vector<3x256xf32>
    %71 = arith.addf %69, %70 : vector<3x256xf32>
    %c1_32 = arith.constant 1 : index
    %c0_33 = arith.constant 0 : index
    %c0_34 = arith.constant 0 : index
    %72 = vector.load %arg7[%c1_32, %c0_33, %c0_34] : memref<2x3x256xf32, #tpu.memory_space<vmem>>, vector<1x3x256xf32>
    %73 = vector.shape_cast %72 : vector<1x3x256xf32> to vector<3x256xf32>
    %74 = vector.shape_cast %71 : vector<3x256xf32> to vector<1x3x256xf32>
    tpu.vector_store %arg7[%c1_32, %c0_33, %c0_34], %74 {strides = array<i32>} : memref<2x3x256xf32, #tpu.memory_space<vmem>>, vector<1x3x256xf32>,
    return
  }
  func.func @transform_0(%arg0: i32) -> (i32, i32, i32) {
    %c0_i32 = arith.constant 0 : i32
    %c0_i32_0 = arith.constant 0 : i32
    %c0_i32_1 = arith.constant 0 : i32
    return %arg0, %c0_i32, %c0_i32_0 : i32, i32, i32
  }
  func.func @transform_1(%arg0: i32) -> (i32, i32, i32) {
    %c0_i32 = arith.constant 0 : i32
    %c0_i32_0 = arith.constant 0 : i32
    %c0_i32_1 = arith.constant 0 : i32
    return %arg0, %c0_i32, %c0_i32_0 : i32, i32, i32
  }
  func.func @transform_2(%arg0: i32) -> (i32, i32) {
    %c0_i32 = arith.constant 0 : i32
    %c0_i32_0 = arith.constant 0 : i32
    %c0_i32_1 = arith.constant 0 : i32
    return %c0_i32, %c0_i32_0 : i32, i32
  }
  func.func @transform_3(%arg0: i32) -> (i32, i32) {
    %c0_i32 = arith.constant 0 : i32
    %c0_i32_0 = arith.constant 0 : i32
    %c0_i32_1 = arith.constant 0 : i32
    return %c0_i32, %c0_i32_0 : i32, i32
  }
  func.func @transform_4(%arg0: i32) -> (i32, i32) {
    %c0_i32 = arith.constant 0 : i32
    %c0_i32_0 = arith.constant 0 : i32
    %c0_i32_1 = arith.constant 0 : i32
    return %c0_i32, %c0_i32_0 : i32, i32
  }
  func.func @transform_5(%arg0: i32) -> (i32, i32) {
    %c0_i32 = arith.constant 0 : i32
    %c0_i32_0 = arith.constant 0 : i32
    %c0_i32_1 = arith.constant 0 : i32
    return %c0_i32, %c0_i32_0 : i32, i32
  }
  func.func @transform_6(%arg0: i32) -> (i32, i32, i32) {
    %c0_i32 = arith.constant 0 : i32
    %c0_i32_0 = arith.constant 0 : i32
    %c0_i32_1 = arith.constant 0 : i32
    return %arg0, %c0_i32, %c0_i32_0 : i32, i32, i32
  }
}

</mosaic_0001>

<llo_original>
// kernel: _forward_jit.1
$region0: #{_forward_jit.1}
  #allocation0 [shape = 'u32[]', space=smem, size = 0x4, offset = 0x4, fixed_abs, tag = 'smem constant byte address 0x4 - core index']
  #allocation1 [shape = 'u32[144,128]{1,0:T(1,128)}', space=vmem, size = 0x12000, scoped, tag = 'internal scratch']
  %s0 = inlined_call_operand.vmem [shape: f32[2,64,256], index: 0, kind: input, shape index: {}]
  %s1 = inlined_call_operand.vmem [shape: f32[2,1,128], index: 1, kind: input, shape index: {}]
  %s2 = inlined_call_operand.vmem [shape: f32[128,128], index: 2, kind: input, shape index: {}]
  %s3 = inlined_call_operand.vmem [shape: f32[128,1], index: 3, kind: input, shape index: {}]
  %s4 = inlined_call_operand.vmem [shape: f32[3,64], index: 4, kind: input, shape index: {}]
  %s5 = inlined_call_operand.vmem [shape: f32[3,1], index: 5, kind: input, shape index: {}]
  %s6 = inlined_call_operand.vmem [shape: f32[2,3,256], index: 6, kind: output, shape index: {}]
  %s7 = sld [smem:[#allocation0]]
  $region34: #{_forward_jit.1} parent=0
    _
  %s9 = ssub.s32 1, %s7
  %s10 = scalar_select 0, %s9, %s7
  // Predicated region
  $region2: #{_forward_jit.1} parent=0 // pred_check
    _
  $region3: #{_forward_jit.1} parent=0 // pred_check_branch
    %12 = sbr.rel (0) target = $region5
  $region4: #{_forward_jit.1} parent=0 // pred_region
    _
  $region5: #{_forward_jit.1} parent=0 // pred_fallthru
    _
  // Predicated region
  $region6: #{_forward_jit.1} parent=0 // pred_check
    _
  $region7: #{_forward_jit.1} parent=0 // pred_check_branch
    %14 = sbr.rel (0) target = $region9
  $region8: #{_forward_jit.1} parent=0 // pred_region
    _
  $region9: #{_forward_jit.1} parent=0 // pred_fallthru
    _
  // Predicated region
  $region10: #{_forward_jit.1} parent=0 // pred_check
    _
  $region11: #{_forward_jit.1} parent=0 // pred_check_branch
    %16 = sbr.rel (0) target = $region13
  $region12: #{_forward_jit.1} parent=0 // pred_region
    _
  $region13: #{_forward_jit.1} parent=0 // pred_fallthru
    _
  // Predicated region
  $region14: #{_forward_jit.1} parent=0 // pred_check
    _
  $region15: #{_forward_jit.1} parent=0 // pred_check_branch
    %18 = sbr.rel (0) target = $region17
  $region16: #{_forward_jit.1} parent=0 // pred_region
    _
  $region17: #{_forward_jit.1} parent=0 // pred_fallthru
    _
  // Predicated region
  $region18: #{_forward_jit.1} parent=0 // pred_check
    _
  $region19: #{_forward_jit.1} parent=0 // pred_check_branch
    %20 = sbr.rel (0) target = $region21
  $region20: #{_forward_jit.1} parent=0 // pred_region
    _
  $region21: #{_forward_jit.1} parent=0 // pred_fallthru
    _
  // Predicated region
  $region22: #{_forward_jit.1} parent=0 // pred_check
    _
  $region23: #{_forward_jit.1} parent=0 // pred_check_branch
    %22 = sbr.rel (0) target = $region25
  $region24: #{_forward_jit.1} parent=0 // pred_region
    _
  $region25: #{_forward_jit.1} parent=0 // pred_fallthru
    _
  %v23 = vld [vmem:[%s1] sm:$0x1]
  %v24 = vld [vmem:[%s1 + $0x1] sm:$0x1]
  %v25 = vld [vmem:[%s2] sm:$0xff]
  %v26 = vld [vmem:[%s2 + $0x8] sm:$0xff]
  %v27 = vld [vmem:[%s2 + $0x10] sm:$0xff]
  %v28 = vld [vmem:[%s2 + $0x18] sm:$0xff]
  %v29 = vld [vmem:[%s2 + $0x20] sm:$0xff]
  %v30 = vld [vmem:[%s2 + $0x28] sm:$0xff]
  %v31 = vld [vmem:[%s2 + $0x30] sm:$0xff]
  %v32 = vld [vmem:[%s2 + $0x38] sm:$0xff]
  %v33 = vld [vmem:[%s2 + $0x40] sm:$0xff]
  %v34 = vld [vmem:[%s2 + $0x48] sm:$0xff]
  %v35 = vld [vmem:[%s2 + $0x50] sm:$0xff]
  %v36 = vld [vmem:[%s2 + $0x58] sm:$0xff]
  %v37 = vld [vmem:[%s2 + $0x60] sm:$0xff]
  %v38 = vld [vmem:[%s2 + $0x68] sm:$0xff]
  %v39 = vld [vmem:[%s2 + $0x70] sm:$0xff]
  %v40 = vld [vmem:[%s2 + $0x78] sm:$0xff]
  %v41 = vld [vmem:[%s3] sm:$0xff]
  %v42 = vld [vmem:[%s3 + $0x8] sm:$0xff]
  %v43 = vld [vmem:[%s3 + $0x10] sm:$0xff]
  %v44 = vld [vmem:[%s3 + $0x18] sm:$0xff]
  %v45 = vld [vmem:[%s3 + $0x20] sm:$0xff]
  %v46 = vld [vmem:[%s3 + $0x28] sm:$0xff]
  %v47 = vld [vmem:[%s3 + $0x30] sm:$0xff]
  %v48 = vld [vmem:[%s3 + $0x38] sm:$0xff]
  %v49 = vld [vmem:[%s3 + $0x40] sm:$0xff]
  %v50 = vld [vmem:[%s3 + $0x48] sm:$0xff]
  %v51 = vld [vmem:[%s3 + $0x50] sm:$0xff]
  %v52 = vld [vmem:[%s3 + $0x58] sm:$0xff]
  %v53 = vld [vmem:[%s3 + $0x60] sm:$0xff]
  %v54 = vld [vmem:[%s3 + $0x68] sm:$0xff]
  %v55 = vld [vmem:[%s3 + $0x70] sm:$0xff]
  %v56 = vld [vmem:[%s3 + $0x78] sm:$0xff]
  %58 = vset.pattern.permute.xlu0 0
  %59 = vperm.xlu0 %58, %v41
  %v60 = vpop.permute.xlu0 %59
  %63 = vset.pattern.permute.xlu0 0
  %64 = vperm.xlu0 %63, %v42
  %v65 = vpop.permute.xlu0 %64
  %68 = vset.pattern.permute.xlu0 0
  %69 = vperm.xlu0 %68, %v43
  %v70 = vpop.permute.xlu0 %69
  %73 = vset.pattern.permute.xlu0 0
  %74 = vperm.xlu0 %73, %v44
  %v75 = vpop.permute.xlu0 %74
  %78 = vset.pattern.permute.xlu0 0
  %79 = vperm.xlu0 %78, %v45
  %v80 = vpop.permute.xlu0 %79
  %83 = vset.pattern.permute.xlu0 0
  %84 = vperm.xlu0 %83, %v46
  %v85 = vpop.permute.xlu0 %84
  %88 = vset.pattern.permute.xlu0 0
  %89 = vperm.xlu0 %88, %v47
  %v90 = vpop.permute.xlu0 %89
  %93 = vset.pattern.permute.xlu0 0
  %94 = vperm.xlu0 %93, %v48
  %v95 = vpop.permute.xlu0 %94
  %98 = vset.pattern.permute.xlu0 0
  %99 = vperm.xlu0 %98, %v49
  %v100 = vpop.permute.xlu0 %99
  %103 = vset.pattern.permute.xlu0 0
  %104 = vperm.xlu0 %103, %v50
  %v105 = vpop.permute.xlu0 %104
  %108 = vset.pattern.permute.xlu0 0
  %109 = vperm.xlu0 %108, %v51
  %v110 = vpop.permute.xlu0 %109
  %113 = vset.pattern.permute.xlu0 0
  %114 = vperm.xlu0 %113, %v52
  %v115 = vpop.permute.xlu0 %114
  %118 = vset.pattern.permute.xlu0 0
  %119 = vperm.xlu0 %118, %v53
  %v120 = vpop.permute.xlu0 %119
  %123 = vset.pattern.permute.xlu0 0
  %124 = vperm.xlu0 %123, %v54
  %v125 = vpop.permute.xlu0 %124
  %128 = vset.pattern.permute.xlu0 0
  %129 = vperm.xlu0 %128, %v55
  %v130 = vpop.permute.xlu0 %129
  %133 = vset.pattern.permute.xlu0 0
  %134 = vperm.xlu0 %133, %v56
  %v135 = vpop.permute.xlu0 %134
  %v139 = vcombine.low %v23, %v24
  %v141 = vunpack.c.l.s4 1966171168
  %v142 = vunpack.c.0.s8 %v141
  %v143 = vlaneseq
  %v144 = vshrl.u32 %v143, 7
  %v145 = vsub.s32 %v142, %v144
  %v146 = vrot.slane %v139, %v145
  %v148 = vunpack.c.l.s4 1966171168
  %v149 = vunpack.c.0.s8 %v148
  %v150 = vlaneseq
  %v151 = vshrl.u32 %v150, 7
  %v152 = vsub.s32 %v149, %v151
  %v153 = vrot.slane %v146, %v152
  %155 = vmatprep.subr.mxu0 0.0
  %156 = vmatpush1.xpose.msra.mxu0 %v153
  %157 = vmatprep.subr.mxu0 0.0
  %158 = vmatpush1.xpose.msra.mxu0 0.0
  %159 = vmatprep.subr.mxu0 0.0
  %160 = vmatpush1.xpose.msra.mxu0 0.0
  %161 = vmatprep.subr.mxu0 0.0
  %162 = vmatpush1.xpose.msra.mxu0 0.0
  %163 = vmatprep.subr.mxu0 0.0
  %164 = vmatpush1.xpose.msra.mxu0 0.0
  %165 = vmatprep.subr.mxu0 0.0
  %166 = vmatpush1.xpose.msra.mxu0 0.0
  %167 = vmatprep.subr.mxu0 0.0
  %168 = vmatpush1.xpose.msra.mxu0 0.0
  %169 = vmatprep.subr.mxu0 0.0
  %170 = vmatpush1.xpose.msra.mxu0 0.0
  %171 = vmatprep.subr.mxu0 0.0
  %172 = vmatpush1.xpose.msra.mxu0 0.0
  %173 = vmatprep.subr.mxu0 0.0
  %174 = vmatpush1.xpose.msra.mxu0 0.0
  %175 = vmatprep.subr.mxu0 0.0
  %176 = vmatpush1.xpose.msra.mxu0 0.0
  %177 = vmatprep.subr.mxu0 0.0
  %178 = vmatpush1.xpose.msra.mxu0 0.0
  %179 = vmatprep.subr.mxu0 0.0
  %180 = vmatpush1.xpose.msra.mxu0 0.0
  %181 = vmatprep.subr.mxu0 0.0
  %182 = vmatpush1.xpose.msra.mxu0 0.0
  %183 = vmatprep.subr.mxu0 0.0
  %184 = vmatpush1.xpose.msra.mxu0 0.0
  %185 = vmatprep.subr.mxu0 0.0
  %186 = vmatpush1.xpose.msra.mxu0 0.0
  %187 = vmatprep.subr.mxu0 0.0
  %188 = vmatpush1.xpose.msra.mxu0 0.0
  %189 = vmatprep.subr.mxu0 0.0
  %190 = vmatpush1.xpose.msra.mxu0 0.0
  %191 = vmatprep.subr.mxu0 0.0
  %192 = vmatpush1.xpose.msra.mxu0 0.0
  %193 = vmatprep.subr.mxu0 0.0
  %194 = vmatpush1.xpose.msra.mxu0 0.0
  %195 = vmatprep.subr.mxu0 0.0
  %196 = vmatpush1.xpose.msra.mxu0 0.0
  %197 = vmatprep.subr.mxu0 0.0
  %198 = vmatpush1.xpose.msra.mxu0 0.0
  %199 = vmatprep.subr.mxu0 0.0
  %200 = vmatpush1.xpose.msra.mxu0 0.0
  %201 = vmatprep.subr.mxu0 0.0
  %202 = vmatpush1.xpose.msra.mxu0 0.0
  %203 = vmatprep.subr.mxu0 0.0
  %204 = vmatpush1.xpose.msra.mxu0 0.0
  %205 = vmatprep.subr.mxu0 0.0
  %206 = vmatpush1.xpose.msra.mxu0 0.0
  %207 = vmatprep.subr.mxu0 0.0
  %208 = vmatpush1.xpose.msra.mxu0 0.0
  %209 = vmatprep.subr.mxu0 0.0
  %210 = vmatpush1.xpose.msra.mxu0 0.0
  %211 = vmatprep.subr.mxu0 0.0
  %212 = vmatpush1.xpose.msra.mxu0 0.0
  %213 = vmatprep.subr.mxu0 0.0
  %214 = vmatpush1.xpose.msra.mxu0 0.0
  %215 = vmatprep.subr.mxu0 0.0
  %216 = vmatpush1.xpose.msra.mxu0 0.0
  %217 = vmatprep.subr.mxu0 0.0
  %218 = vmatpush1.xpose.msra.mxu0 0.0
  %219 = vmatprep.mubr.f32.mxu0 0.0
  %220 = vmatmul.mubr.f32.gmra.mrb[0].mxu0 %v25
  %v221 = vpop.f32.mrb[0].mxu0
  %v222 = vadd.f32 %v60, %v221
  %v223 = vpop.f32.mrb[0].mxu0
  %224 = vmatprep.mubr.f32.mxu0 0.0
  %225 = vmatmul.mubr.f32.gmra.mrb[0].mxu0 %v26
  %v226 = vpop.f32.mrb[0].mxu0
  %v227 = vadd.f32 %v65, %v226
  %v228 = vpop.f32.mrb[0].mxu0
  %229 = vmatprep.mubr.f32.mxu0 0.0
  %230 = vmatmul.mubr.f32.gmra.mrb[0].mxu0 %v27
  %v231 = vpop.f32.mrb[0].mxu0
  %v232 = vadd.f32 %v70, %v231
  %v233 = vpop.f32.mrb[0].mxu0
  %234 = vmatprep.mubr.f32.mxu0 0.0
  %235 = vmatmul.mubr.f32.gmra.mrb[0].mxu0 %v28
  %v236 = vpop.f32.mrb[0].mxu0
  %v237 = vadd.f32 %v75, %v236
  %v238 = vpop.f32.mrb[0].mxu0
  %239 = vmatprep.mubr.f32.mxu0 0.0
  %240 = vmatmul.mubr.f32.gmra.mrb[0].mxu0 %v29
  %v241 = vpop.f32.mrb[0].mxu0
  %v242 = vadd.f32 %v80, %v241
  %v243 = vpop.f32.mrb[0].mxu0
  %244 = vmatprep.mubr.f32.mxu0 0.0
  %245 = vmatmul.mubr.f32.gmra.mrb[0].mxu0 %v30
  %v246 = vpop.f32.mrb[0].mxu0
  %v247 = vadd.f32 %v85, %v246
  %v248 = vpop.f32.mrb[0].mxu0
  %249 = vmatprep.mubr.f32.mxu0 0.0
  %250 = vmatmul.mubr.f32.gmra.mrb[0].mxu0 %v31
  %v251 = vpop.f32.mrb[0].mxu0
  %v252 = vadd.f32 %v90, %v251
  %v253 = vpop.f32.mrb[0].mxu0
  %254 = vmatprep.mubr.f32.mxu0 0.0
  %255 = vmatmul.mubr.f32.gmra.mrb[0].mxu0 %v32
  %v256 = vpop.f32.mrb[0].mxu0
  %v257 = vadd.f32 %v95, %v256
  %v258 = vpop.f32.mrb[0].mxu0
  %259 = vmatprep.mubr.f32.mxu0 0.0
  %260 = vmatmul.mubr.f32.gmra.mrb[0].mxu0 %v33
  %v261 = vpop.f32.mrb[0].mxu0
  %v262 = vadd.f32 %v100, %v261
  %v263 = vpop.f32.mrb[0].mxu0
  %264 = vmatprep.mubr.f32.mxu0 0.0
  %265 = vmatmul.mubr.f32.gmra.mrb[0].mxu0 %v34
  %v266 = vpop.f32.mrb[0].mxu0
  %v267 = vadd.f32 %v105, %v266
  %v268 = vpop.f32.mrb[0].mxu0
  %269 = vmatprep.mubr.f32.mxu0 0.0
  %270 = vmatmul.mubr.f32.gmra.mrb[0].mxu0 %v35
  %v271 = vpop.f32.mrb[0].mxu0
  %v272 = vadd.f32 %v110, %v271
  %v273 = vpop.f32.mrb[0].mxu0
  %274 = vmatprep.mubr.f32.mxu0 0.0
  %275 = vmatmul.mubr.f32.gmra.mrb[0].mxu0 %v36
  %v276 = vpop.f32.mrb[0].mxu0
  %v277 = vadd.f32 %v115, %v276
  %v278 = vpop.f32.mrb[0].mxu0
  %279 = vmatprep.mubr.f32.mxu0 0.0
  %280 = vmatmul.mubr.f32.gmra.mrb[0].mxu0 %v37
  %v281 = vpop.f32.mrb[0].mxu0
  %v282 = vadd.f32 %v120, %v281
  %v283 = vpop.f32.mrb[0].mxu0
  %284 = vmatprep.mubr.f32.mxu0 0.0
  %285 = vmatmul.mubr.f32.gmra.mrb[0].mxu0 %v38
  %v286 = vpop.f32.mrb[0].mxu0
  %v287 = vadd.f32 %v125, %v286
  %v288 = vpop.f32.mrb[0].mxu0
  %289 = vmatprep.mubr.f32.mxu0 0.0
  %290 = vmatmul.mubr.f32.gmra.mrb[0].mxu0 %v39
  %v291 = vpop.f32.mrb[0].mxu0
  %v292 = vadd.f32 %v130, %v291
  %v293 = vpop.f32.mrb[0].mxu0
  %294 = vmatprep.mubr.f32.mxu0 0.0
  %295 = vmatmul.mubr.f32.gmra.mrb[0].mxu0 %v40
  %v296 = vpop.f32.mrb[0].mxu0
  %v297 = vadd.f32 %v135, %v296
  %v298 = vpop.f32.mrb[0].mxu0
  %299 = vdwg.mxu0
  %v300 = vld [vmem:[%s4] sm:$0x7]
  %v301 = vld [vmem:[%s5] sm:$0x7]
  %v302 = vld [vmem:[%s0] sm:$0xff]
  %v303 = vld [vmem:[%s0 + $0x8] sm:$0xff]
  %v304 = vld [vmem:[%s0 + $0x10] sm:$0xff]
  %v305 = vld [vmem:[%s0 + $0x18] sm:$0xff]
  %v306 = vld [vmem:[%s0 + $0x20] sm:$0xff]
  %v307 = vld [vmem:[%s0 + $0x28] sm:$0xff]
  %v308 = vld [vmem:[%s0 + $0x30] sm:$0xff]
  %v309 = vld [vmem:[%s0 + $0x38] sm:$0xff]
  %v310 = vld [vmem:[%s0 + $0x40] sm:$0xff]
  %v311 = vld [vmem:[%s0 + $0x48] sm:$0xff]
  %v312 = vld [vmem:[%s0 + $0x50] sm:$0xff]
  %v313 = vld [vmem:[%s0 + $0x58] sm:$0xff]
  %v314 = vld [vmem:[%s0 + $0x60] sm:$0xff]
  %v315 = vld [vmem:[%s0 + $0x68] sm:$0xff]
  %v316 = vld [vmem:[%s0 + $0x70] sm:$0xff]
  %v317 = vld [vmem:[%s0 + $0x78] sm:$0xff]
  %v318 = vadd.f32 %v302, %v303
  %319 = vadd.xlane.f32.xlu0 %v318
  %v320 = vpop.xlane.xlu0 %319
  %v321 = vadd.f32 %v304, %v305
  %322 = vadd.xlane.f32.xlu0 %v321
  %v323 = vpop.xlane.xlu0 %322
  %v324 = vadd.f32 %v306, %v307
  %325 = vadd.xlane.f32.xlu0 %v324
  %v326 = vpop.xlane.xlu0 %325
  %v327 = vadd.f32 %v308, %v309
  %328 = vadd.xlane.f32.xlu0 %v327
  %v329 = vpop.xlane.xlu0 %328
  %v330 = vadd.f32 %v310, %v311
  %331 = vadd.xlane.f32.xlu0 %v330
  %v332 = vpop.xlane.xlu0 %331
  %v333 = vadd.f32 %v312, %v313
  %334 = vadd.xlane.f32.xlu0 %v333
  %v335 = vpop.xlane.xlu0 %334
  %v336 = vadd.f32 %v314, %v315
  %337 = vadd.xlane.f32.xlu0 %v336
  %v338 = vpop.xlane.xlu0 %337
  %v339 = vadd.f32 %v316, %v317
  %340 = vadd.xlane.f32.xlu0 %v339
  %v341 = vpop.xlane.xlu0 %340
  %v342 = vrcp.pop 256.0
  %v343 = vmul.f32 %v320, %v342
  %v344 = vmul.f32 %v323, %v342
  %v345 = vmul.f32 %v326, %v342
  %v346 = vmul.f32 %v329, %v342
  %v347 = vmul.f32 %v332, %v342
  %v348 = vmul.f32 %v335, %v342
  %v349 = vmul.f32 %v338, %v342
  %v350 = vmul.f32 %v341, %v342
  %v351 = vsub.f32 %v302, %v343
  %v352 = vsub.f32 %v303, %v343
  %v353 = vsub.f32 %v304, %v344
  %v354 = vsub.f32 %v305, %v344
  %v355 = vsub.f32 %v306, %v345
  %v356 = vsub.f32 %v307, %v345
  %v357 = vsub.f32 %v308, %v346
  %v358 = vsub.f32 %v309, %v346
  %v359 = vsub.f32 %v310, %v347
  %v360 = vsub.f32 %v311, %v347
  %v361 = vsub.f32 %v312, %v348
  %v362 = vsub.f32 %v313, %v348
  %v363 = vsub.f32 %v314, %v349
  %v364 = vsub.f32 %v315, %v349
  %v365 = vsub.f32 %v316, %v350
  %v366 = vsub.f32 %v317, %v350
  %v367 = vmul.f32 %v351, %v351
  %v368 = vmul.f32 %v352, %v352
  %v369 = vmul.f32 %v353, %v353
  %v370 = vmul.f32 %v354, %v354
  %v371 = vmul.f32 %v355, %v355
  %v372 = vmul.f32 %v356, %v356
  %v373 = vmul.f32 %v357, %v357
  %v374 = vmul.f32 %v358, %v358
  %v375 = vmul.f32 %v359, %v359
  %v376 = vmul.f32 %v360, %v360
  %v377 = vmul.f32 %v361, %v361
  %v378 = vmul.f32 %v362, %v362
  %v379 = vmul.f32 %v363, %v363
  %v380 = vmul.f32 %v364, %v364
  %v381 = vmul.f32 %v365, %v365
  %v382 = vmul.f32 %v366, %v366
  %v383 = vadd.f32 %v367, %v368
  %384 = vadd.xlane.f32.xlu0 %v383
  %v385 = vpop.xlane.xlu0 %384
  %v386 = vadd.f32 %v369, %v370
  %387 = vadd.xlane.f32.xlu0 %v386
  %v388 = vpop.xlane.xlu0 %387
  %v389 = vadd.f32 %v371, %v372
  %390 = vadd.xlane.f32.xlu0 %v389
  %v391 = vpop.xlane.xlu0 %390
  %v392 = vadd.f32 %v373, %v374
  %393 = vadd.xlane.f32.xlu0 %v392
  %v394 = vpop.xlane.xlu0 %393
  %v395 = vadd.f32 %v375, %v376
  %396 = vadd.xlane.f32.xlu0 %v395
  %v397 = vpop.xlane.xlu0 %396
  %v398 = vadd.f32 %v377, %v378
  %399 = vadd.xlane.f32.xlu0 %v398
  %v400 = vpop.xlane.xlu0 %399
  %v401 = vadd.f32 %v379, %v380
  %402 = vadd.xlane.f32.xlu0 %v401
  %v403 = vpop.xlane.xlu0 %402
  %v404 = vadd.f32 %v381, %v382
  %405 = vadd.xlane.f32.xlu0 %v404
  %v406 = vpop.xlane.xlu0 %405
  %v407 = vmul.f32 %v385, %v342
  %v408 = vmul.f32 %v388, %v342
  %v409 = vmul.f32 %v391, %v342
  %v410 = vmul.f32 %v394, %v342
  %v411 = vmul.f32 %v397, %v342
  %v412 = vmul.f32 %v400, %v342
  %v413 = vmul.f32 %v403, %v342
  %v414 = vmul.f32 %v406, %v342
  %v415 = vadd.f32 %v407, 1e-05
  %v416 = vadd.f32 %v408, 1e-05
  %v417 = vadd.f32 %v409, 1e-05
  %v418 = vadd.f32 %v410, 1e-05
  %v419 = vadd.f32 %v411, 1e-05
  %v420 = vadd.f32 %v412, 1e-05
  %v421 = vadd.f32 %v413, 1e-05
  %v422 = vadd.f32 %v414, 1e-05
  %v423 = vrsqrt.pop %v415
  %v424 = vrsqrt.pop %v416
  %v425 = vrsqrt.pop %v417
  %v426 = vrsqrt.pop %v418
  %v427 = vrsqrt.pop %v419
  %v428 = vrsqrt.pop %v420
  %v429 = vrsqrt.pop %v421
  %v430 = vrsqrt.pop %v422
  %v431 = vadd.f32 %v222, 1.0
  %v432 = vadd.f32 %v227, 1.0
  %v433 = vadd.f32 %v232, 1.0
  %v434 = vadd.f32 %v237, 1.0
  %v435 = vadd.f32 %v242, 1.0
  %v436 = vadd.f32 %v247, 1.0
  %v437 = vadd.f32 %v252, 1.0
  %v438 = vadd.f32 %v257, 1.0
  %v439 = vmul.f32 %v431, %v423
  %v440 = vmul.f32 %v432, %v424
  %v441 = vmul.f32 %v433, %v425
  %v442 = vmul.f32 %v434, %v426
  %v443 = vmul.f32 %v435, %v427
  %v444 = vmul.f32 %v436, %v428
  %v445 = vmul.f32 %v437, %v429
  %v446 = vmul.f32 %v438, %v430
  %v447 = vmul.f32 %v343, %v439
  %v448 = vmul.f32 %v344, %v440
  %v449 = vmul.f32 %v345, %v441
  %v450 = vmul.f32 %v346, %v442
  %v451 = vmul.f32 %v347, %v443
  %v452 = vmul.f32 %v348, %v444
  %v453 = vmul.f32 %v349, %v445
  %v454 = vmul.f32 %v350, %v446
  %v455 = vsub.f32 %v262, %v447
  %v456 = vsub.f32 %v267, %v448
  %v457 = vsub.f32 %v272, %v449
  %v458 = vsub.f32 %v277, %v450
  %v459 = vsub.f32 %v282, %v451
  %v460 = vsub.f32 %v287, %v452
  %v461 = vsub.f32 %v292, %v453
  %v462 = vsub.f32 %v297, %v454
  %464 = vset.pattern.permute.xlu0 0
  %465 = vperm.xlu0 %464, %v439
  %v466 = vpop.permute.xlu0 %465
  %469 = vset.pattern.permute.xlu0 0
  %470 = vperm.xlu0 %469, %v440
  %v471 = vpop.permute.xlu0 %470
  %474 = vset.pattern.permute.xlu0 0
  %475 = vperm.xlu0 %474, %v441
  %v476 = vpop.permute.xlu0 %475
  %479 = vset.pattern.permute.xlu0 0
  %480 = vperm.xlu0 %479, %v442
  %v481 = vpop.permute.xlu0 %480
  %484 = vset.pattern.permute.xlu0 0
  %485 = vperm.xlu0 %484, %v443
  %v486 = vpop.permute.xlu0 %485
  %489 = vset.pattern.permute.xlu0 0
  %490 = vperm.xlu0 %489, %v444
  %v491 = vpop.permute.xlu0 %490
  %494 = vset.pattern.permute.xlu0 0
  %495 = vperm.xlu0 %494, %v445
  %v496 = vpop.permute.xlu0 %495
  %499 = vset.pattern.permute.xlu0 0
  %500 = vperm.xlu0 %499, %v446
  %v501 = vpop.permute.xlu0 %500
  %v503 = vmul.f32 %v302, %v466
  %v504 = vmul.f32 %v303, %v466
  %v505 = vmul.f32 %v304, %v471
  %v506 = vmul.f32 %v305, %v471
  %v507 = vmul.f32 %v306, %v476
  %v508 = vmul.f32 %v307, %v476
  %v509 = vmul.f32 %v308, %v481
  %v510 = vmul.f32 %v309, %v481
  %v511 = vmul.f32 %v310, %v486
  %v512 = vmul.f32 %v311, %v486
  %v513 = vmul.f32 %v312, %v491
  %v514 = vmul.f32 %v313, %v491
  %v515 = vmul.f32 %v314, %v496
  %v516 = vmul.f32 %v315, %v496
  %v517 = vmul.f32 %v316, %v501
  %v518 = vmul.f32 %v317, %v501
  %520 = vset.pattern.permute.xlu0 0
  %521 = vperm.xlu0 %520, %v455
  %v522 = vpop.permute.xlu0 %521
  %525 = vset.pattern.permute.xlu0 0
  %526 = vperm.xlu0 %525, %v456
  %v527 = vpop.permute.xlu0 %526
  %530 = vset.pattern.permute.xlu0 0
  %531 = vperm.xlu0 %530, %v457
  %v532 = vpop.permute.xlu0 %531
  %535 = vset.pattern.permute.xlu0 0
  %536 = vperm.xlu0 %535, %v458
  %v537 = vpop.permute.xlu0 %536
  %540 = vset.pattern.permute.xlu0 0
  %541 = vperm.xlu0 %540, %v459
  %v542 = vpop.permute.xlu0 %541
  %545 = vset.pattern.permute.xlu0 0
  %546 = vperm.xlu0 %545, %v460
  %v547 = vpop.permute.xlu0 %546
  %550 = vset.pattern.permute.xlu0 0
  %551 = vperm.xlu0 %550, %v461
  %v552 = vpop.permute.xlu0 %551
  %555 = vset.pattern.permute.xlu0 0
  %556 = vperm.xlu0 %555, %v462
  %v557 = vpop.permute.xlu0 %556
  %v559 = vadd.f32 %v503, %v522
  %v560 = vadd.f32 %v504, %v522
  %v561 = vadd.f32 %v505, %v527
  %v562 = vadd.f32 %v506, %v527
  %v563 = vadd.f32 %v507, %v532
  %v564 = vadd.f32 %v508, %v532
  %v565 = vadd.f32 %v509, %v537
  %v566 = vadd.f32 %v510, %v537
  %v567 = vadd.f32 %v511, %v542
  %v568 = vadd.f32 %v512, %v542
  %v569 = vadd.f32 %v513, %v547
  %v570 = vadd.f32 %v514, %v547
  %v571 = vadd.f32 %v515, %v552
  %v572 = vadd.f32 %v516, %v552
  %v573 = vadd.f32 %v517, %v557
  %v574 = vadd.f32 %v518, %v557
  %576 = vset.pattern.permute.xlu0 0
  %577 = vperm.xlu0 %576, %v301
  %v578 = vpop.permute.xlu0 %577
  %vm580 = vcmask 523264
  %v582 = vsel %vm580, %v300, 0
  %584 = vmatprep.subr.mxu0 %v560
  %585 = vmatpush1.msra.mxu0 %v559
  %586 = vmatprep.subr.mxu0 %v562
  %587 = vmatpush1.msra.mxu0 %v561
  %588 = vmatprep.subr.mxu0 %v564
  %589 = vmatpush1.msra.mxu0 %v563
  %590 = vmatprep.subr.mxu0 %v566
  %591 = vmatpush1.msra.mxu0 %v565
  %592 = vmatprep.subr.mxu0 %v568
  %593 = vmatpush1.msra.mxu0 %v567
  %594 = vmatprep.subr.mxu0 %v570
  %595 = vmatpush1.msra.mxu0 %v569
  %596 = vmatprep.subr.mxu0 %v572
  %597 = vmatpush1.msra.mxu0 %v571
  %598 = vmatprep.subr.mxu0 %v574
  %599 = vmatpush1.msra.mxu0 %v573
  %600 = vmatprep.subr.mxu0 0.0
  %601 = vmatpush1.msra.mxu0 0.0
  %602 = vmatprep.subr.mxu0 0.0
  %603 = vmatpush1.msra.mxu0 0.0
  %604 = vmatprep.subr.mxu0 0.0
  %605 = vmatpush1.msra.mxu0 0.0
  %606 = vmatprep.subr.mxu0 0.0
  %607 = vmatpush1.msra.mxu0 0.0
  %608 = vmatprep.subr.mxu0 0.0
  %609 = vmatpush1.msra.mxu0 0.0
  %610 = vmatprep.subr.mxu0 0.0
  %611 = vmatpush1.msra.mxu0 0.0
  %612 = vmatprep.subr.mxu0 0.0
  %613 = vmatpush1.msra.mxu0 0.0
  %614 = vmatprep.subr.mxu0 0.0
  %615 = vmatpush1.msra.mxu0 0.0
  %616 = vmatprep.subr.mxu0 0.0
  %617 = vmatpush1.msra.mxu0 0.0
  %618 = vmatprep.subr.mxu0 0.0
  %619 = vmatpush1.msra.mxu0 0.0
  %620 = vmatprep.subr.mxu0 0.0
  %621 = vmatpush1.msra.mxu0 0.0
  %622 = vmatprep.subr.mxu0 0.0
  %623 = vmatpush1.msra.mxu0 0.0
  %624 = vmatprep.subr.mxu0 0.0
  %625 = vmatpush1.msra.mxu0 0.0
  %626 = vmatprep.subr.mxu0 0.0
  %627 = vmatpush1.msra.mxu0 0.0
  %628 = vmatprep.subr.mxu0 0.0
  %629 = vmatpush1.msra.mxu0 0.0
  %630 = vmatprep.subr.mxu0 0.0
  %631 = vmatpush1.msra.mxu0 0.0
  %632 = vmatprep.subr.mxu0 0.0
  %633 = vmatpush1.msra.mxu0 0.0
  %634 = vmatprep.subr.mxu0 0.0
  %635 = vmatpush1.msra.mxu0 0.0
  %636 = vmatprep.subr.mxu0 0.0
  %637 = vmatpush1.msra.mxu0 0.0
  %638 = vmatprep.subr.mxu0 0.0
  %639 = vmatpush1.msra.mxu0 0.0
  %640 = vmatprep.subr.mxu0 0.0
  %641 = vmatpush1.msra.mxu0 0.0
  %642 = vmatprep.subr.mxu0 0.0
  %643 = vmatpush1.msra.mxu0 0.0
  %644 = vmatprep.subr.mxu0 0.0
  %645 = vmatpush1.msra.mxu0 0.0
  %646 = vmatprep.subr.mxu0 0.0
  %647 = vmatpush1.msra.mxu0 0.0
  %648 = vmatprep.mubr.f32.mxu0 0.0
  %649 = vmatmul.mubr.f32.gmra.mrb[0].mxu0 %v582
  %v650 = vpop.f32.mrb[0].mxu0
  %v651 = vadd.f32 %v578, %v650
  %v652 = vpop.f32.mrb[0].mxu0
  %v653 = vadd.f32 %v578, %v652
  %654 = vdwg.mxu0
  %v657 = vcombine.low %v651, %v653
  %659 = vst [vmem:[%s6] sm:$0x77] %v657
  %s660 = scalar_lea.vmem %s0, 128
  %v661 = vld [vmem:[%s660] sm:$0xff]
  %v662 = vld [vmem:[%s660 + $0x8] sm:$0xff]
  %v663 = vld [vmem:[%s660 + $0x10] sm:$0xff]
  %v664 = vld [vmem:[%s660 + $0x18] sm:$0xff]
  %v665 = vld [vmem:[%s660 + $0x20] sm:$0xff]
  %v666 = vld [vmem:[%s660 + $0x28] sm:$0xff]
  %v667 = vld [vmem:[%s660 + $0x30] sm:$0xff]
  %v668 = vld [vmem:[%s660 + $0x38] sm:$0xff]
  %v669 = vld [vmem:[%s660 + $0x40] sm:$0xff]
  %v670 = vld [vmem:[%s660 + $0x48] sm:$0xff]
  %v671 = vld [vmem:[%s660 + $0x50] sm:$0xff]
  %v672 = vld [vmem:[%s660 + $0x58] sm:$0xff]
  %v673 = vld [vmem:[%s660 + $0x60] sm:$0xff]
  %v674 = vld [vmem:[%s660 + $0x68] sm:$0xff]
  %v675 = vld [vmem:[%s660 + $0x70] sm:$0xff]
  %v676 = vld [vmem:[%s660 + $0x78] sm:$0xff]
  %v677 = vadd.f32 %v661, %v662
  %678 = vadd.xlane.f32.xlu0 %v677
  %v679 = vpop.xlane.xlu0 %678
  %v680 = vadd.f32 %v663, %v664
  %681 = vadd.xlane.f32.xlu0 %v680
  %v682 = vpop.xlane.xlu0 %681
  %v683 = vadd.f32 %v665, %v666
  %684 = vadd.xlane.f32.xlu0 %v683
  %v685 = vpop.xlane.xlu0 %684
  %v686 = vadd.f32 %v667, %v668
  %687 = vadd.xlane.f32.xlu0 %v686
  %v688 = vpop.xlane.xlu0 %687
  %v689 = vadd.f32 %v669, %v670
  %690 = vadd.xlane.f32.xlu0 %v689
  %v691 = vpop.xlane.xlu0 %690
  %v692 = vadd.f32 %v671, %v672
  %693 = vadd.xlane.f32.xlu0 %v692
  %v694 = vpop.xlane.xlu0 %693
  %v695 = vadd.f32 %v673, %v674
  %696 = vadd.xlane.f32.xlu0 %v695
  %v697 = vpop.xlane.xlu0 %696
  %v698 = vadd.f32 %v675, %v676
  %699 = vadd.xlane.f32.xlu0 %v698
  %v700 = vpop.xlane.xlu0 %699
  %v701 = vmul.f32 %v679, %v342
  %v702 = vmul.f32 %v682, %v342
  %v703 = vmul.f32 %v685, %v342
  %v704 = vmul.f32 %v688, %v342
  %v705 = vmul.f32 %v691, %v342
  %v706 = vmul.f32 %v694, %v342
  %v707 = vmul.f32 %v697, %v342
  %v708 = vmul.f32 %v700, %v342
  %v709 = vsub.f32 %v661, %v701
  %v710 = vsub.f32 %v662, %v701
  %v711 = vsub.f32 %v663, %v702
  %v712 = vsub.f32 %v664, %v702
  %v713 = vsub.f32 %v665, %v703
  %v714 = vsub.f32 %v666, %v703
  %v715 = vsub.f32 %v667, %v704
  %v716 = vsub.f32 %v668, %v704
  %v717 = vsub.f32 %v669, %v705
  %v718 = vsub.f32 %v670, %v705
  %v719 = vsub.f32 %v671, %v706
  %v720 = vsub.f32 %v672, %v706
  %v721 = vsub.f32 %v673, %v707
  %v722 = vsub.f32 %v674, %v707
  %v723 = vsub.f32 %v675, %v708
  %v724 = vsub.f32 %v676, %v708
  %v725 = vmul.f32 %v709, %v709
  %v726 = vmul.f32 %v710, %v710
  %v727 = vmul.f32 %v711, %v711
  %v728 = vmul.f32 %v712, %v712
  %v729 = vmul.f32 %v713, %v713
  %v730 = vmul.f32 %v714, %v714
  %v731 = vmul.f32 %v715, %v715
  %v732 = vmul.f32 %v716, %v716
  %v733 = vmul.f32 %v717, %v717
  %v734 = vmul.f32 %v718, %v718
  %v735 = vmul.f32 %v719, %v719
  %v736 = vmul.f32 %v720, %v720
  %v737 = vmul.f32 %v721, %v721
  %v738 = vmul.f32 %v722, %v722
  %v739 = vmul.f32 %v723, %v723
  %v740 = vmul.f32 %v724, %v724
  %v741 = vadd.f32 %v725, %v726
  %742 = vadd.xlane.f32.xlu0 %v741
  %v743 = vpop.xlane.xlu0 %742
  %v744 = vadd.f32 %v727, %v728
  %745 = vadd.xlane.f32.xlu0 %v744
  %v746 = vpop.xlane.xlu0 %745
  %v747 = vadd.f32 %v729, %v730
  %748 = vadd.xlane.f32.xlu0 %v747
  %v749 = vpop.xlane.xlu0 %748
  %v750 = vadd.f32 %v731, %v732
  %751 = vadd.xlane.f32.xlu0 %v750
  %v752 = vpop.xlane.xlu0 %751
  %v753 = vadd.f32 %v733, %v734
  %754 = vadd.xlane.f32.xlu0 %v753
  %v755 = vpop.xlane.xlu0 %754
  %v756 = vadd.f32 %v735, %v736
  %757 = vadd.xlane.f32.xlu0 %v756
  %v758 = vpop.xlane.xlu0 %757
  %v759 = vadd.f32 %v737, %v738
  %760 = vadd.xlane.f32.xlu0 %v759
  %v761 = vpop.xlane.xlu0 %760
  %v762 = vadd.f32 %v739, %v740
  %763 = vadd.xlane.f32.xlu0 %v762
  %v764 = vpop.xlane.xlu0 %763
  %v765 = vmul.f32 %v743, %v342
  %v766 = vmul.f32 %v746, %v342
  %v767 = vmul.f32 %v749, %v342
  %v768 = vmul.f32 %v752, %v342
  %v769 = vmul.f32 %v755, %v342
  %v770 = vmul.f32 %v758, %v342
  %v771 = vmul.f32 %v761, %v342
  %v772 = vmul.f32 %v764, %v342
  %v773 = vadd.f32 %v765, 1e-05
  %v774 = vadd.f32 %v766, 1e-05
  %v775 = vadd.f32 %v767, 1e-05
  %v776 = vadd.f32 %v768, 1e-05
  %v777 = vadd.f32 %v769, 1e-05
  %v778 = vadd.f32 %v770, 1e-05
  %v779 = vadd.f32 %v771, 1e-05
  %v780 = vadd.f32 %v772, 1e-05
  %v781 = vrsqrt.pop %v773
  %v782 = vrsqrt.pop %v774
  %v783 = vrsqrt.pop %v775
  %v784 = vrsqrt.pop %v776
  %v785 = vrsqrt.pop %v777
  %v786 = vrsqrt.pop %v778
  %v787 = vrsqrt.pop %v779
  %v788 = vrsqrt.pop %v780
  %v789 = vmul.f32 %v431, %v781
  %v790 = vmul.f32 %v432, %v782
  %v791 = vmul.f32 %v433, %v783
  %v792 = vmul.f32 %v434, %v784
  %v793 = vmul.f32 %v435, %v785
  %v794 = vmul.f32 %v436, %v786
  %v795 = vmul.f32 %v437, %v787
  %v796 = vmul.f32 %v438, %v788
  %v797 = vmul.f32 %v701, %v789
  %v798 = vmul.f32 %v702, %v790
  %v799 = vmul.f32 %v703, %v791
  %v800 = vmul.f32 %v704, %v792
  %v801 = vmul.f32 %v705, %v793
  %v802 = vmul.f32 %v706, %v794
  %v803 = vmul.f32 %v707, %v795
  %v804 = vmul.f32 %v708, %v796
  %v805 = vsub.f32 %v262, %v797
  %v806 = vsub.f32 %v267, %v798
  %v807 = vsub.f32 %v272, %v799
  %v808 = vsub.f32 %v277, %v800
  %v809 = vsub.f32 %v282, %v801
  %v810 = vsub.f32 %v287, %v802
  %v811 = vsub.f32 %v292, %v803
  %v812 = vsub.f32 %v297, %v804
  %814 = vset.pattern.permute.xlu0 1
  %815 = vperm.xlu0 %814, %v789
  %v816 = vpop.permute.xlu0 %815
  %819 = vset.pattern.permute.xlu0 1
  %820 = vperm.xlu0 %819, %v790
  %v821 = vpop.permute.xlu0 %820
  %824 = vset.pattern.permute.xlu0 1
  %825 = vperm.xlu0 %824, %v791
  %v826 = vpop.permute.xlu0 %825
  %829 = vset.pattern.permute.xlu0 1
  %830 = vperm.xlu0 %829, %v792
  %v831 = vpop.permute.xlu0 %830
  %834 = vset.pattern.permute.xlu0 1
  %835 = vperm.xlu0 %834, %v793
  %v836 = vpop.permute.xlu0 %835
  %839 = vset.pattern.permute.xlu0 1
  %840 = vperm.xlu0 %839, %v794
  %v841 = vpop.permute.xlu0 %840
  %844 = vset.pattern.permute.xlu0 1
  %845 = vperm.xlu0 %844, %v795
  %v846 = vpop.permute.xlu0 %845
  %849 = vset.pattern.permute.xlu0 1
  %850 = vperm.xlu0 %849, %v796
  %v851 = vpop.permute.xlu0 %850
  %v853 = vmul.f32 %v661, %v816
  %v854 = vmul.f32 %v662, %v816
  %v855 = vmul.f32 %v663, %v821
  %v856 = vmul.f32 %v664, %v821
  %v857 = vmul.f32 %v665, %v826
  %v858 = vmul.f32 %v666, %v826
  %v859 = vmul.f32 %v667, %v831
  %v860 = vmul.f32 %v668, %v831
  %v861 = vmul.f32 %v669, %v836
  %v862 = vmul.f32 %v670, %v836
  %v863 = vmul.f32 %v671, %v841
  %v864 = vmul.f32 %v672, %v841
  %v865 = vmul.f32 %v673, %v846
  %v866 = vmul.f32 %v674, %v846
  %v867 = vmul.f32 %v675, %v851
  %v868 = vmul.f32 %v676, %v851
  %870 = vset.pattern.permute.xlu0 1
  %871 = vperm.xlu0 %870, %v805
  %v872 = vpop.permute.xlu0 %871
  %875 = vset.pattern.permute.xlu0 1
  %876 = vperm.xlu0 %875, %v806
  %v877 = vpop.permute.xlu0 %876
  %880 = vset.pattern.permute.xlu0 1
  %881 = vperm.xlu0 %880, %v807
  %v882 = vpop.permute.xlu0 %881
  %885 = vset.pattern.permute.xlu0 1
  %886 = vperm.xlu0 %885, %v808
  %v887 = vpop.permute.xlu0 %886
  %890 = vset.pattern.permute.xlu0 1
  %891 = vperm.xlu0 %890, %v809
  %v892 = vpop.permute.xlu0 %891
  %895 = vset.pattern.permute.xlu0 1
  %896 = vperm.xlu0 %895, %v810
  %v897 = vpop.permute.xlu0 %896
  %900 = vset.pattern.permute.xlu0 1
  %901 = vperm.xlu0 %900, %v811
  %v902 = vpop.permute.xlu0 %901
  %905 = vset.pattern.permute.xlu0 1
  %906 = vperm.xlu0 %905, %v812
  %v907 = vpop.permute.xlu0 %906
  %v909 = vadd.f32 %v853, %v872
  %v910 = vadd.f32 %v854, %v872
  %v911 = vadd.f32 %v855, %v877
  %v912 = vadd.f32 %v856, %v877
  %v913 = vadd.f32 %v857, %v882
  %v914 = vadd.f32 %v858, %v882
  %v915 = vadd.f32 %v859, %v887
  %v916 = vadd.f32 %v860, %v887
  %v917 = vadd.f32 %v861, %v892
  %v918 = vadd.f32 %v862, %v892
  %v919 = vadd.f32 %v863, %v897
  %v920 = vadd.f32 %v864, %v897
  %v921 = vadd.f32 %v865, %v902
  %v922 = vadd.f32 %v866, %v902
  %v923 = vadd.f32 %v867, %v907
  %v924 = vadd.f32 %v868, %v907
  %925 = vmatprep.subr.mxu0 %v910
  %926 = vmatpush1.msra.mxu0 %v909
  %927 = vmatprep.subr.mxu0 %v912
  %928 = vmatpush1.msra.mxu0 %v911
  %929 = vmatprep.subr.mxu0 %v914
  %930 = vmatpush1.msra.mxu0 %v913
  %931 = vmatprep.subr.mxu0 %v916
  %932 = vmatpush1.msra.mxu0 %v915
  %933 = vmatprep.subr.mxu0 %v918
  %934 = vmatpush1.msra.mxu0 %v917
  %935 = vmatprep.subr.mxu0 %v920
  %936 = vmatpush1.msra.mxu0 %v919
  %937 = vmatprep.subr.mxu0 %v922
  %938 = vmatpush1.msra.mxu0 %v921
  %939 = vmatprep.subr.mxu0 %v924
  %940 = vmatpush1.msra.mxu0 %v923
  %941 = vmatprep.subr.mxu0 0.0
  %942 = vmatpush1.msra.mxu0 0.0
  %943 = vmatprep.subr.mxu0 0.0
  %944 = vmatpush1.msra.mxu0 0.0
  %945 = vmatprep.subr.mxu0 0.0
  %946 = vmatpush1.msra.mxu0 0.0
  %947 = vmatprep.subr.mxu0 0.0
  %948 = vmatpush1.msra.mxu0 0.0
  %949 = vmatprep.subr.mxu0 0.0
  %950 = vmatpush1.msra.mxu0 0.0
  %951 = vmatprep.subr.mxu0 0.0
  %952 = vmatpush1.msra.mxu0 0.0
  %953 = vmatprep.subr.mxu0 0.0
  %954 = vmatpush1.msra.mxu0 0.0
  %955 = vmatprep.subr.mxu0 0.0
  %956 = vmatpush1.msra.mxu0 0.0
  %957 = vmatprep.subr.mxu0 0.0
  %958 = vmatpush1.msra.mxu0 0.0
  %959 = vmatprep.subr.mxu0 0.0
  %960 = vmatpush1.msra.mxu0 0.0
  %961 = vmatprep.subr.mxu0 0.0
  %962 = vmatpush1.msra.mxu0 0.0
  %963 = vmatprep.subr.mxu0 0.0
  %964 = vmatpush1.msra.mxu0 0.0
  %965 = vmatprep.subr.mxu0 0.0
  %966 = vmatpush1.msra.mxu0 0.0
  %967 = vmatprep.subr.mxu0 0.0
  %968 = vmatpush1.msra.mxu0 0.0
  %969 = vmatprep.subr.mxu0 0.0
  %970 = vmatpush1.msra.mxu0 0.0
  %971 = vmatprep.subr.mxu0 0.0
  %972 = vmatpush1.msra.mxu0 0.0
  %973 = vmatprep.subr.mxu0 0.0
  %974 = vmatpush1.msra.mxu0 0.0
  %975 = vmatprep.subr.mxu0 0.0
  %976 = vmatpush1.msra.mxu0 0.0
  %977 = vmatprep.subr.mxu0 0.0
  %978 = vmatpush1.msra.mxu0 0.0
  %979 = vmatprep.subr.mxu0 0.0
  %980 = vmatpush1.msra.mxu0 0.0
  %981 = vmatprep.subr.mxu0 0.0
  %982 = vmatpush1.msra.mxu0 0.0
  %983 = vmatprep.subr.mxu0 0.0
  %984 = vmatpush1.msra.mxu0 0.0
  %985 = vmatprep.subr.mxu0 0.0
  %986 = vmatpush1.msra.mxu0 0.0
  %987 = vmatprep.subr.mxu0 0.0
  %988 = vmatpush1.msra.mxu0 0.0
  %989 = vmatprep.mubr.f32.mxu0 0.0
  %990 = vmatmul.mubr.f32.gmra.mrb[0].mxu0 %v582
  %v991 = vpop.f32.mrb[0].mxu0
  %v992 = vadd.f32 %v578, %v991
  %v993 = vpop.f32.mrb[0].mxu0
  %v994 = vadd.f32 %v578, %v993
  %995 = vdwg.mxu0
  %v998 = vcombine.low %v992, %v994
  %s1000 = scalar_lea.vmem %s6, 8
  %1001 = vst [vmem:[%s1000] sm:$0x77] %v998
  // Predicated region
  $region26: #{_forward_jit.1} parent=0 // pred_check
    _
  $region27: #{_forward_jit.1} parent=0 // pred_check_branch
    %1003 = sbr.rel (0) target = $region29
  $region28: #{_forward_jit.1} parent=0 // pred_region
    _
  $region29: #{_forward_jit.1} parent=0 // pred_fallthru
    _
  // Predicated region
  $region30: #{_forward_jit.1} parent=0 // pred_check
    _
  $region31: #{_forward_jit.1} parent=0 // pred_check_branch
    %1005 = sbr.rel (0) target = $region33
  $region32: #{_forward_jit.1} parent=0 // pred_region
    _
  $region33: #{_forward_jit.1} parent=0 // pred_fallthru
    _

</llo_original>
